<compile_context>
chip_gen: v5e
topology: v5e:2x2
jax: 0.10.0
libtpu: 0.0.40
codegen_flags: <defaults>
</compile_context>

<pallas_src>
import functools

import jax
import jax.numpy as jnp
from jax.experimental import pallas as pl
from jax.experimental.pallas import tpu as pltpu


def _focal_power(x, gamma):
    """x**gamma with a VALU multiply-chain fast path for integer gamma."""
    g = float(gamma)
    if g == 0.0:
        return jnp.ones_like(x)
    if g.is_integer() and 1.0 <= g <= 8.0:
        n = int(g)
        r = x
        for _ in range(n - 1):
            r = r * x
        return r
    return x ** g  # general (non-integer) case: log+exp on the EUP


def _focal_loss_kernel(logits_ref, targets_ref, weights_ref, out_ref, *,
                       gamma, batch_size, tile_b):
    i = pl.program_id(0)

    logits = logits_ref[...]          # (TB, C) f32
    targets = targets_ref[...]        # (TB, 1) i32
    weights = weights_ref[...]        # (1, C)  f32

    # log-softmax statistics. Only full-tile transcendental is the exp the LSE
    # needs; log_prob itself is never materialized over (TB, C).
    m = jnp.max(logits, axis=-1, keepdims=True)                           # (TB, 1)
    lse = jnp.log(jnp.sum(jnp.exp(logits - m), axis=-1, keepdims=True))   # (TB, 1)

    # One-hot target mask, built once and reused for both "gathers".
    cls = jax.lax.broadcasted_iota(jnp.int32, logits.shape, 1)
    onehot = (cls == targets).astype(jnp.float32)                         # (TB, C)

    logit_t = jnp.sum(onehot * logits, axis=-1, keepdims=True)            # (TB, 1)
    alpha = jnp.sum(onehot * weights, axis=-1, keepdims=True)             # (TB, 1)

    log_p_t = logit_t - m - lse                                           # (TB, 1)
    p_t = jnp.exp(log_p_t)            # TB exps instead of TB*C
    focal = _focal_power(1.0 - p_t, gamma)
    loss = -alpha * focal * log_p_t                                       # (TB, 1)

    # Mask rows that are batch padding (last partial tile contributes 0).
    row = i * tile_b + jax.lax.broadcasted_iota(jnp.int32, loss.shape, 0)
    loss = jnp.where(row < batch_size, loss, 0.0)

    # Per-tile partial sum, broadcast over a full (8, 128) block so the store is
    # lane-dense / unmasked. The wrapper finishes the mean (divide by true B).
    psum = jnp.sum(loss, keepdims=True)                                   # (1, 1)
    out_ref[...] = jnp.broadcast_to(psum, out_ref.shape)


def _choose_tile(batch, num_classes):
    """Batch tile sized so the double-buffered working set fits every TPU
    generation's scoped-VMEM default (v5e 16 MiB, v7x 64 MiB physical)."""
    c_pad = max(128, ((num_classes + 127) // 128) * 128)  # lane footprint in VMEM
    budget = 2 * 1024 * 1024                               # ~2 MiB per logits buffer
    tb = budget // (c_pad * 4)
    tb = max(8, min(2048, (tb // 8) * 8))
    b_pad8 = ((batch + 7) // 8) * 8
    tb = min(tb, b_pad8)
    return tb, c_pad


def weighted_focal_loss(logits, targets, class_weights=None, gamma=2.0):
    """Pallas-backed weighted focal loss. Returns a scalar (mean over batch)."""
    logits = jnp.asarray(logits, jnp.float32)
    B, C = logits.shape
    targets2d = jnp.asarray(targets, jnp.int32).reshape(B, 1)
    if class_weights is None:
        weights = jnp.ones((1, C), jnp.float32)
    else:
        weights = jnp.asarray(class_weights, jnp.float32).reshape(1, C)

    tb, c_pad = _choose_tile(B, C)
    grid = pl.cdiv(B, tb)
    b_pad = grid * tb
    if b_pad != B:
        logits = jnp.pad(logits, ((0, b_pad - B), (0, 0)))
        targets2d = jnp.pad(targets2d, ((0, b_pad - B), (0, 0)))

    # Explicit VMEM budget: double-buffered logits/targets tiles + weights + out.
    vmem_need = (2 * tb * c_pad * 4 + 2 * tb * 128 * 4
                 + 2 * 8 * c_pad * 4 + 2 * 8 * 128 * 4)
    vmem_limit = int(min(max(2 * vmem_need + (4 << 20), 16 << 20), 64 << 20))

    cost = pl.CostEstimate(
        flops=10 * B * C,
        transcendentals=B * C + 3 * B,   # exp for LSE + log/exp per row
        bytes_accessed=4 * B * C + 4 * B + 4 * C + grid * 8 * 128 * 4,
    )

    out = pl.pallas_call(
        functools.partial(_focal_loss_kernel, gamma=float(gamma),
                          batch_size=B, tile_b=tb),
        out_shape=jax.ShapeDtypeStruct((grid * 8, 128), jnp.float32),
        grid=(grid,),
        in_specs=[
            pl.BlockSpec((tb, C), lambda i: (i, 0)),
            pl.BlockSpec((tb, 1), lambda i: (i, 0)),
            # Constant index_map: same block every step, no per-step re-fetch needed.
            pl.BlockSpec((1, C), lambda i: (0, 0)),
        ],
        out_specs=pl.BlockSpec((8, 128), lambda i: (i, 0)),
        compiler_params=pltpu.CompilerParams(
            dimension_semantics=("parallel",),
            vmem_limit_bytes=vmem_limit,
        ),
        cost_estimate=cost,
    )(logits, targets2d, weights)

    # One partial sum per tile (every element of a tile's (8,128) block equals it).
    partial = out.reshape(grid, 8, 128)[:, 0, 0]
    return jnp.sum(partial) / B


def _reference_focal_loss(logits, targets, class_weights, gamma):
    log_prob = jax.nn.log_softmax(logits, axis=1)
    prob = jnp.exp(log_prob)
    b = jnp.arange(targets.shape[0])
    p_t = prob[b, targets]
    log_p_t = log_prob[b, targets]
    focal = (1.0 - p_t) ** gamma
    alpha = class_weights[targets] if class_weights is not None else 1.0
    return jnp.mean(-alpha * focal * log_p_t)


if __name__ == "__main__":
    key = jax.random.PRNGKey(0)
    k_logits, k_tgt = jax.random.split(key)

    B, C = 8, 4
    gamma = 2.0
    class_weights = jnp.array([1.0, 2.0, 1.0, 1.0], jnp.float32)

    logits = jax.random.normal(k_logits, (B, C), jnp.float32)
    targets = jax.random.randint(k_tgt, (B,), 0, C, jnp.int32)

    loss = weighted_focal_loss(logits, targets, class_weights, gamma)
    loss = jax.block_until_ready(loss)

    ref = _reference_focal_loss(logits, targets, class_weights, gamma)
    assert jnp.allclose(loss, ref, rtol=1e-5, atol=1e-6), (loss, ref)

    print("KERNEL_OK")
</pallas_src>

<mosaic_0001>
module attributes {stable_mosaic.version = 11 : i64} {
  func.func @_focal_loss_kernel(%arg0: i32, %arg1: memref<8x4xf32, #tpu.memory_space<vmem>>, %arg2: memref<8x1xi32, #tpu.memory_space<vmem>>, %arg3: memref<1x4xf32, #tpu.memory_space<vmem>>, %arg4: memref<8x128xf32, #tpu.memory_space<vmem>>) attributes {dimension_semantics = [#tpu.dimension_semantics<parallel>], iteration_bounds = array<i64: 1>, scalar_prefetch = 0 : i64, scratch_operands = 0 : i64, tpu.core_type = #tpu.core_type<tc>, window_params = [{transform_indices = @transform_0, window_bounds = array<i64: 8, 4>}, {transform_indices = @transform_1, window_bounds = array<i64: 8, 1>}, {pipeline_mode = #tpu.pipeline_mode<synchronous>, transform_indices = @transform_2, window_bounds = array<i64: 1, 4>}, {transform_indices = @transform_3, window_bounds = array<i64: 8, 128>}]} {
    %c0 = arith.constant 0 : index
    %c0_0 = arith.constant 0 : index
    %0 = vector.load %arg1[%c0, %c0_0] : memref<8x4xf32, #tpu.memory_space<vmem>>, vector<8x4xf32>
    %c0_1 = arith.constant 0 : index
    %c0_2 = arith.constant 0 : index
    %1 = vector.load %arg2[%c0_1, %c0_2] : memref<8x1xi32, #tpu.memory_space<vmem>>, vector<8x1xi32>
    %c0_3 = arith.constant 0 : index
    %c0_4 = arith.constant 0 : index
    %2 = vector.load %arg3[%c0_3, %c0_4] : memref<1x4xf32, #tpu.memory_space<vmem>>, vector<1x4xf32>
    %cst = arith.constant dense<0xFF800000> : vector<8xf32>
    %3 = vector.multi_reduction <maximumf>, %0, %cst [1] : vector<8x4xf32> to vector<8xf32>
    %4 = vector.shape_cast %3 : vector<8xf32> to vector<8x1xf32>
    %5 = vector.broadcast %4 : vector<8x1xf32> to vector<8x4xf32>
    %6 = arith.subf %0, %5 : vector<8x4xf32>
    %7 = math.exp %6 : vector<8x4xf32>
    %cst_5 = arith.constant dense<0.000000e+00> : vector<8xf32>
    %8 = vector.multi_reduction <add>, %7, %cst_5 [1] : vector<8x4xf32> to vector<8xf32>
    %9 = vector.shape_cast %8 : vector<8xf32> to vector<8x1xf32>
    %10 = math.log %9 : vector<8x1xf32>
    %11 = tpu.iota {dimensions = array<i32: 1>} : vector<8x4xi32>
    %12 = vector.broadcast %1 : vector<8x1xi32> to vector<8x4xi32>
    %13 = arith.cmpi eq, %11, %12 : vector<8x4xi32>
    %14 = arith.extui %13 : vector<8x4xi1> to vector<8x4xi32>
    %15 = arith.sitofp %14 : vector<8x4xi32> to vector<8x4xf32>
    %16 = arith.mulf %15, %0 : vector<8x4xf32>
    %cst_6 = arith.constant dense<0.000000e+00> : vector<8xf32>
    %17 = vector.multi_reduction <add>, %16, %cst_6 [1] : vector<8x4xf32> to vector<8xf32>
    %18 = vector.shape_cast %17 : vector<8xf32> to vector<8x1xf32>
    %19 = vector.broadcast %2 : vector<1x4xf32> to vector<8x4xf32>
    %20 = arith.mulf %15, %19 : vector<8x4xf32>
    %cst_7 = arith.constant dense<0.000000e+00> : vector<8xf32>
    %21 = vector.multi_reduction <add>, %20, %cst_7 [1] : vector<8x4xf32> to vector<8xf32>
    %22 = vector.shape_cast %21 : vector<8xf32> to vector<8x1xf32>
    %23 = arith.subf %18, %4 : vector<8x1xf32>
    %24 = arith.subf %23, %10 : vector<8x1xf32>
    %25 = math.exp %24 : vector<8x1xf32>
    %cst_8 = arith.constant 1.000000e+00 : f32
    %26 = vector.broadcast %cst_8 : f32 to vector<8x1xf32>
    %27 = arith.subf %26, %25 : vector<8x1xf32>
    %28 = arith.mulf %27, %27 : vector<8x1xf32>
    %cst_9 = arith.constant 0.000000e+00 : f32
    %29 = vector.broadcast %cst_9 : f32 to vector<8x1xf32>
    %30 = arith.subf %29, %22 : vector<8x1xf32>
    %31 = arith.mulf %30, %28 : vector<8x1xf32>
    %32 = arith.mulf %31, %24 : vector<8x1xf32>
    %c8_i32 = arith.constant 8 : i32
    %33 = arith.muli %arg0, %c8_i32 : i32
    %34 = tpu.iota {dimensions = array<i32: 0>} : vector<8x1xi32>
    %35 = vector.broadcast %33 : i32 to vector<8x1xi32>
    %36 = arith.addi %35, %34 : vector<8x1xi32>
    %c8_i32_10 = arith.constant 8 : i32
    %37 = vector.broadcast %c8_i32_10 : i32 to vector<8x1xi32>
    %38 = arith.cmpi slt, %36, %37 : vector<8x1xi32>
    %cst_11 = arith.constant 0.000000e+00 : f32
    %39 = vector.broadcast %cst_11 : f32 to vector<8x1xf32>
    %40 = arith.select %38, %32, %39 : vector<8x1xi1>, vector<8x1xf32>
    %41 = vector.shape_cast %40 : vector<8x1xf32> to vector<1x8x1xf32>
    %cst_12 = arith.constant dense<0.000000e+00> : vector<1xf32>
    %42 = vector.multi_reduction <add>, %41, %cst_12 [1, 2] : vector<1x8x1xf32> to vector<1xf32>
    %43 = vector.shape_cast %42 : vector<1xf32> to vector<1x1x1xf32>
    %44 = vector.extract %43[0, 0, 0] : f32 from vector<1x1x1xf32>
    %45 = vector.broadcast %44 : f32 to vector<1x1xf32>
    %46 = vector.shape_cast %45 : vector<1x1xf32> to vector<1x1xf32>
    %47 = vector.broadcast %46 : vector<1x1xf32> to vector<8x128xf32>
    %c0_13 = arith.constant 0 : index
    %c0_14 = arith.constant 0 : index
    %48 = vector.load %arg4[%c0_13, %c0_14] : memref<8x128xf32, #tpu.memory_space<vmem>>, vector<8x128xf32>
    tpu.vector_store %arg4[%c0_13, %c0_14], %47 {strides = array<i32>} : memref<8x128xf32, #tpu.memory_space<vmem>>, vector<8x128xf32>,
    return
  }
  func.func @transform_0(%arg0: i32) -> (i32, i32) {
    %c0_i32 = arith.constant 0 : i32
    %c0_i32_0 = arith.constant 0 : i32
    return %arg0, %c0_i32 : i32, i32
  }
  func.func @transform_1(%arg0: i32) -> (i32, i32) {
    %c0_i32 = arith.constant 0 : i32
    %c0_i32_0 = arith.constant 0 : i32
    return %arg0, %c0_i32 : i32, i32
  }
  func.func @transform_2(%arg0: i32) -> (i32, i32) {
    %c0_i32 = arith.constant 0 : i32
    %c0_i32_0 = arith.constant 0 : i32
    %c0_i32_1 = arith.constant 0 : i32
    return %c0_i32, %c0_i32_0 : i32, i32
  }
  func.func @transform_3(%arg0: i32) -> (i32, i32) {
    %c0_i32 = arith.constant 0 : i32
    %c0_i32_0 = arith.constant 0 : i32
    return %arg0, %c0_i32 : i32, i32
  }
}

</mosaic_0001>

<llo_original>
// kernel: tpu_custom_call.1
$region0: #{tpu_custom_call.1}
  #allocation0 [shape = 'u32[]', space=smem, size = 0x4, offset = 0x4, fixed_abs, tag = 'smem constant byte address 0x4 - core index']
  #allocation1 [shape = 'u32[72,128]{1,0:T(1,128)}', space=vmem, size = 0x9000, scoped, tag = 'internal scratch']
  %s0 = inlined_call_operand.vmem [shape: f32[8,4], index: 0, kind: input, shape index: {}]
  %s1 = inlined_call_operand.vmem [shape: s32[8,1], index: 1, kind: input, shape index: {}]
  %s2 = inlined_call_operand.vmem [shape: f32[1,4], index: 2, kind: input, shape index: {}]
  %s3 = inlined_call_operand.hbm [shape: f32[8,128], index: 3, kind: output, shape index: {}]
  %s4 = sld [smem:[#allocation0]]
  $region22: #{tpu_custom_call.1} parent=0
    _
  %s6 = ssub.s32 1, %s4
  %s7 = scalar_select 0, %s6, %s4
  $region1: #{tpu_custom_call.1} parent=0
    #allocation2 [shape = 'u8[4096]{0}', space=vmem, size = 0x1000, scoped, tag = 'output window, operand 0, single buffered']
    #allocation3 [shape = 's32[1]{0}', space=sflag, size = 0x4, scoped, tag = 'scoped memory for tpu_custom_call.1']
    %8 = vsyncpa [#allocation3], 0
    // Predicated region
    $region2: #{tpu_custom_call.1} parent=1 // pred_check
      _
    $region3: #{tpu_custom_call.1} parent=1 // pred_check_branch
      %10 = sbr.rel (0) target = $region5
    $region4: #{tpu_custom_call.1} parent=1 // pred_region
      _
    $region5: #{tpu_custom_call.1} parent=1 // pred_fallthru
      _
    // Predicated region
    $region6: #{tpu_custom_call.1} parent=1 // pred_check
      _
    $region7: #{tpu_custom_call.1} parent=1 // pred_check_branch
      %12 = sbr.rel (0) target = $region9
    $region8: #{tpu_custom_call.1} parent=1 // pred_region
      _
    $region9: #{tpu_custom_call.1} parent=1 // pred_fallthru
      _
    // Predicated region
    $region10: #{tpu_custom_call.1} parent=1 // pred_check
      _
    $region11: #{tpu_custom_call.1} parent=1 // pred_check_branch
      %14 = sbr.rel (0) target = $region13
    $region12: #{tpu_custom_call.1} parent=1 // pred_region
      _
    $region13: #{tpu_custom_call.1} parent=1 // pred_fallthru
      _
    %v15 = vld [vmem:[%s0] sm:$0xff]
    %v16 = vld [vmem:[%s1] sm:$0xff]
    %v17 = vld [vmem:[%s2] sm:$0x1]
    %vm18 = vcmask 31744
    %v19 = vsel %vm18, %v15, -inf
    %20 = vmax.xlane.f32.xlu0 %v19
    %v21 = vpop.xlane.xlu0 %20
    %v22 = vsub.f32 %v15, %v21
    %v23 = vmul.f32 %v22, 1.442695
    %v24 = vpow.pop %v23
    %v25 = vsel %vm18, %v24, 0.0
    %26 = vadd.xlane.f32.xlu0 %v25
    %v27 = vpop.xlane.xlu0 %26
    %v28 = vlog2.pop %v27
    %v29 = vmul.f32 %v28, 0.6931472
    %v30 = vlaneseq
    %v31 = vand.u32 %v30, 127
    %32 = vset.pattern.permute.xlu0 0
    %33 = vperm.xlu0 %32, %v16
    %v34 = vpop.permute.xlu0 %33
    %vm35 = vcmp.eq.s32.totalorder %v31, %v34
    %v36 = vsel %vm35, 1, 0
    %v37 = vcvt.s32.f32 %v36
    %v38 = vmul.f32 %v37, %v15
    %v39 = vsel %vm18, %v38, 0.0
    %40 = vadd.xlane.f32.xlu0 %v39
    %v41 = vpop.xlane.xlu0 %40
    %v43 = vperm.slane %v17, 0
    %v45 = vmul.f32 %v37, %v43
    %v46 = vsel %vm18, %v45, 0.0
    %47 = vadd.xlane.f32.xlu0 %v46
    %v48 = vpop.xlane.xlu0 %47
    %v49 = vsub.f32 %v41, %v21
    %v50 = vsub.f32 %v49, %v29
    %v51 = vmul.f32 %v50, 1.442695
    %v52 = vpow.pop %v51
    %v53 = vsub.f32 1.0, %v52
    %v54 = vmul.f32 %v53, %v53
    %v55 = vsub.f32 0.0, %v48
    %v56 = vmul.f32 %v55, %v54
    %v57 = vmul.f32 %v56, %v50
    %s58 = smul.u32 0, 8
    %v59 = vlaneseq
    %v60 = vshrl.u32 %v59, 7
    %v61 = vstv %s58
    %v62 = vadd.s32 %v61, %v60
    %vm63 = vcmp.lt.s32.totalorder %v62, 8
    %v64 = vsel %vm63, %v57, 0.0
    %vm65 = vcmask 7168
    %v66 = vsel %vm65, %v64, 0.0
    %67 = vadd.xlane.f32.xlu0 %v66
    %v68 = vpop.xlane.xlu0 %67
    %v69 = vrot.slane %v68, 4
    %v70 = vadd.f32 %v68, %v69
    %v71 = vrot.slane %v70, 2
    %v72 = vadd.f32 %v70, %v71
    %v73 = vrot.slane %v72, 1
    %v74 = vadd.f32 %v72, %v73
    %s75 = vtos %v74
    %v76 = vstv %s75
    %77 = vst [vmem:[#allocation2] sm:$0xff] %v76
    // Predicated region
    $region14: #{tpu_custom_call.1} parent=1 // pred_check
      _
    $region15: #{tpu_custom_call.1} parent=1 // pred_check_branch
      %79 = sbr.rel (0) target = $region17
    $region16: #{tpu_custom_call.1} parent=1 // pred_region
      %81 = vsyncadd [#allocation3], 0
      %s83 = sshll.u32 [#allocation2], 4
      %s84 = int_to_ptr.vmem [resolvable:$true] %s83
      %s85 = sshll.u32 %s3, 4
      %s86 = int_to_ptr.hbm [resolvable:$true] %s85
      %88 = dma.vmem_to_hbm [thread:$0]  %s84, 128, %s86, [#allocation3]
    $region17: #{tpu_custom_call.1} parent=1 // pred_fallthru
      _
    // Predicated region
    $region18: #{tpu_custom_call.1} parent=1 // pred_check
      _
    $region19: #{tpu_custom_call.1} parent=1 // pred_check_branch
      %90 = sbr.rel (0) target = $region21
    $region20: #{tpu_custom_call.1} parent=1 // pred_region
      %92 = dma.done [#allocation3], 128
    $region21: #{tpu_custom_call.1} parent=1 // pred_fallthru
      _
    %93 = vsyncpa [#allocation3], 1

</llo_original>
